<compile_context>
chip_gen: v7x
topology: tpu7x:2x2x1
jax: 0.10.0
libtpu: 0.0.40
codegen_flags: <defaults>
</compile_context>

<pallas_src>
import jax
import jax.numpy as jnp
from jax.experimental import pallas as pl
from jax.experimental.pallas import tpu as pltpu


def _round_up(x, m):
    return ((x + m - 1) // m) * m


def _physical_vmem_bytes():
    # v5e/v6e: 128 MiB physical VMEM, v7x: 64 MiB.  Conservative fallback if
    # the trace-time query is unavailable.
    try:
        return int(pltpu.get_tpu_info().vmem_capacity_bytes)
    except Exception:
        return 64 * 1024 * 1024


def _select_tiling(c, hw, in_itemsize, out_itemsize):
    """Pick the k-row tile (TM), B buffer count, and a vmem_limit_bytes.

    Accounts for double-buffered A/output tiles, the per-batch B slab, the
    sum-of-squares output and the f32 intermediate, all with on-chip
    (sublane=8, lane=128) padding.
    """
    lane_hw = _round_up(hw, 128)
    lane_c = _round_up(c, 128)
    sub_c = _round_up(c, 8)

    def need(tm, b_bufs):
        a_bytes = 2 * tm * lane_c * in_itemsize            # A tile (double buffered)
        b_bytes = b_bufs * sub_c * lane_hw * in_itemsize   # per-batch B slab
        o_bytes = 2 * tm * lane_hw * out_itemsize          # corr tile (double buffered)
        ss_bytes = 2 * 8 * lane_hw * 4                     # sum-of-squares output
        tmp_bytes = tm * lane_hw * 4                       # f32 corr intermediate
        return a_bytes + b_bytes + o_bytes + ss_bytes + tmp_bytes

    cap = _physical_vmem_bytes()
    budget = int(cap * 0.7)

    candidates = []
    if hw <= 512:
        # Small map (the canonical 15x15/16x16/25x25 case): one k step per
        # batch so per-grid-step overhead does not dominate the tiny traffic.
        candidates.append(_round_up(hw, 8))
    candidates += [256, 128, 64, 32, 16, 8]

    for tm in candidates:
        for b_bufs in (2, 1):   # single-buffer B before shrinking tiles
            n = need(tm, b_bufs)
            if n <= budget:
                limit = min(max(2 * n, 32 * 1024 * 1024), budget)
                return tm, b_bufs, int(limit)
    return 8, 1, int(budget)


def _corr_relu_kernel(a_ref, b_ref, o_ref, ss_ref):
    # a_ref : (TM, c)   rows k..k+TM of w-major-flattened feature_A (zero-padded rows)
    # b_ref : (c,  hw)  feature_B flattened row-major over (ih, iw)
    # o_ref : (TM, hw)  relu(corr) tile              (masked edge store on padded rows/lanes)
    # ss_ref: (1,  hw)  sum_k relu(corr)^2, f32, resident across the k axis
    t = pl.program_id(1)

    @pl.when(t == 0)
    def _init():
        ss_ref[...] = jnp.zeros_like(ss_ref)

    corr = jnp.dot(a_ref[...], b_ref[...], preferred_element_type=jnp.float32)
    corr = jnp.maximum(corr, 0.0)            # fused ReLU: VPU slot is free when store-bound
    ss_ref[...] += jnp.sum(corr * corr, axis=0, keepdims=True)   # XLU slot, also free
    o_ref[...] = corr.astype(o_ref.dtype)


def feature_correlation_relu(feature_A, feature_B, *, out_dtype=None):
    """relu(FeatureCorrelation(A, B)) plus sum_k relu(...)^2 (for FeatureL2Norm).

    Returns:
      relu_corr: (b, h*w, h, w) in `out_dtype` (default: input dtype)
      sumsq    : (b, h, w) float32
    """
    b, c, h, w = feature_A.shape
    hw = h * w
    if out_dtype is None:
        out_dtype = feature_A.dtype
    in_itemsize = jnp.dtype(feature_A.dtype).itemsize
    out_itemsize = jnp.dtype(out_dtype).itemsize

    # Wrapper-side layout plumbing touches only the small c*hw inputs, never
    # the hw^2 output.  k = kw*h + kh matches PyTorch transpose(2,3).view.
    # TODO(synk): if the upstream feature extractor can emit NHWC directly,
    #             this transpose disappears.
    a_kc = jnp.transpose(feature_A, (0, 3, 2, 1)).reshape(b, hw, c)
    b_ci = feature_B.reshape(b, c, hw)

    TM, b_bufs, vmem_limit = _select_tiling(c, hw, in_itemsize, out_itemsize)
    n_ktiles = pl.cdiv(hw, TM)
    hw_k = n_ktiles * TM
    if hw_k > hw:
        # Zero-pad only the tiny LHS: padded k rows contribute exactly 0 to the
        # fused sum-of-squares, and the matching output rows are dropped by the
        # masked edge store (no post-kernel crop pass over the hw^2 output).
        a_kc = jnp.pad(a_kc, ((0, 0), (0, hw_k - hw), (0, 0)))

    b_spec_kwargs = {} if b_bufs == 2 else {"pipeline_mode": pl.Buffered(1)}

    cost = pl.CostEstimate(
        flops=2 * b * hw_k * hw * c + 2 * b * hw_k * hw,
        transcendentals=0,
        bytes_accessed=(in_itemsize * b * (hw_k * c + c * hw)
                        + out_itemsize * b * hw * hw
                        + 4 * b * hw),
    )

    relu_corr, sumsq = pl.pallas_call(
        _corr_relu_kernel,
        out_shape=(
            jax.ShapeDtypeStruct((b, hw, hw), out_dtype),
            jax.ShapeDtypeStruct((b, 1, hw), jnp.float32),
        ),
        grid_spec=pltpu.PrefetchScalarGridSpec(
            num_scalar_prefetch=0,
            grid=(b, n_ktiles),
            in_specs=[
                # A tile: TM rows of (hw_k, c); tiny channel dim in lanes.
                pl.BlockSpec((None, TM, c), lambda n, t: (n, t, 0)),
                # B slab: full (c, hw) per batch; same block across all k tiles
                # so it is fetched once per batch.
                pl.BlockSpec((None, c, hw), lambda n, t: (n, 0, 0), **b_spec_kwargs),
            ],
            out_specs=[
                pl.BlockSpec((None, TM, hw), lambda n, t: (n, t, 0)),
                # Same block across the k axis -> resident f32 accumulator.
                pl.BlockSpec((None, 1, hw), lambda n, t: (n, 0, 0)),
            ],
        ),
        compiler_params=pltpu.CompilerParams(
            # batch axis is independent -> megacore shards it on v7x (each core
            # keeps its own B slab); k axis carries the sumsq accumulator.
            dimension_semantics=("parallel", "arbitrary"),
            vmem_limit_bytes=vmem_limit,
        ),
        cost_estimate=cost,
    )(a_kc, b_ci)

    return relu_corr.reshape(b, hw, h, w), sumsq.reshape(b, h, w)


def feature_correlation_relu_l2norm(feature_A, feature_B, *, out_dtype=None,
                                    epsilon=1e-6):
    """FeatureL2Norm(ReLU(FeatureCorrelation(A, B))) — the module's exact chain."""
    relu_corr, sumsq = feature_correlation_relu(feature_A, feature_B,
                                                out_dtype=out_dtype)
    norm = jnp.sqrt(sumsq + epsilon)[:, None, :, :]          # (b, 1, h, w)
    return (relu_corr.astype(jnp.float32) / norm).astype(relu_corr.dtype)


def reference_forward(feature_A, feature_B):
    """Pure-JAX mirror of the PyTorch ops: correlation, ReLU, sumsq, L2-normalized."""
    b, c, h, w = feature_A.shape
    fa = jnp.transpose(feature_A, (0, 1, 3, 2)).reshape(b, c, h * w)   # k = kw*h + kh
    fb = jnp.transpose(feature_B.reshape(b, c, h * w), (0, 2, 1))      # i = ih*w + iw
    mul = jnp.einsum("bic,bck->bik", fb, fa,
                     precision=jax.lax.Precision.HIGHEST)              # (b, i, k)
    corr = jnp.transpose(mul.reshape(b, h, w, h * w), (0, 3, 1, 2))    # (b, hw, h, w)
    relu = jnp.maximum(corr, 0.0)
    sumsq = jnp.sum(relu * relu, axis=1)                               # (b, h, w)
    norm = jnp.sqrt(sumsq + 1e-6)[:, None, :, :]
    return relu, sumsq, relu / norm


if __name__ == "__main__":
    key = jax.random.PRNGKey(0)
    ka, kb = jax.random.split(key)

    # Small shapes consistent with the module's correlation stage (b, c, h, w);
    # the real net feeds (b, 512, 25, 25) here.
    b, c, h, w = 2, 4, 16, 16
    fa = jax.random.normal(ka, (b, c, h, w), dtype=jnp.float32)
    fb = jax.random.normal(kb, (b, c, h, w), dtype=jnp.float32)

    relu_corr, sumsq = feature_correlation_relu(fa, fb)
    relu_corr = jax.block_until_ready(relu_corr)
    normalized = jax.block_until_ready(feature_correlation_relu_l2norm(fa, fb))

    ref_relu, ref_ss, ref_norm = reference_forward(fa, fb)
    assert relu_corr.shape == (b, h * w, h, w), relu_corr.shape
    assert sumsq.shape == (b, h, w), sumsq.shape
    # Tolerances absorb MXU f32 pass-count differences vs the HIGHEST-precision
    # XLA reference; semantic/indexing bugs would show up as O(1) errors.
    assert jnp.allclose(relu_corr, ref_relu, atol=3e-2, rtol=3e-2), "relu corr mismatch"
    assert jnp.allclose(sumsq, ref_ss, atol=5e-1, rtol=3e-2), "sumsq mismatch"
    assert jnp.allclose(normalized, ref_norm, atol=3e-2, rtol=3e-2), "l2norm mismatch"

    # Non-128-aligned spatial size (15x15 -> masked-edge store path, no crop pass).
    h2 = w2 = 15
    fa2 = jax.random.normal(ka, (b, c, h2, w2), dtype=jnp.float32)
    fb2 = jax.random.normal(kb, (b, c, h2, w2), dtype=jnp.float32)
    out2, ss2 = feature_correlation_relu(fa2, fb2)
    out2 = jax.block_until_ready(out2)
    r2_relu, r2_ss, _ = reference_forward(fa2, fb2)
    assert out2.shape == (b, h2 * w2, h2, w2), out2.shape
    assert jnp.allclose(out2, r2_relu, atol=3e-2, rtol=3e-2), "relu corr mismatch (15x15)"
    assert jnp.allclose(ss2, r2_ss, atol=5e-1, rtol=3e-2), "sumsq mismatch (15x15)"

    # bf16 path (review item: halve the store-bound writeback). Accumulation is
    # still f32 in-kernel; only the stored correlation is bf16, so it differs
    # from a pure-f32 run at bf16 precision (documented / acceptable).
    fa16, fb16 = fa.astype(jnp.bfloat16), fb.astype(jnp.bfloat16)
    out16, ss16 = feature_correlation_relu(fa16, fb16)
    out16 = jax.block_until_ready(out16)
    ref16, _, _ = reference_forward(fa16.astype(jnp.float32), fb16.astype(jnp.float32))
    assert out16.dtype == jnp.bfloat16
    assert jnp.allclose(out16.astype(jnp.float32), ref16, atol=8e-2, rtol=8e-2), \
        "bf16 path mismatch"

    print("KERNEL_OK")
</pallas_src>

<mosaic_0001>
module attributes {stable_mosaic.version = 11 : i64} {
  func.func @_corr_relu_kernel(%arg0: i32, %arg1: i32, %arg2: memref<1x256x4xf32, #tpu.memory_space<vmem>>, %arg3: memref<1x4x256xf32, #tpu.memory_space<vmem>>, %arg4: memref<1x256x256xf32, #tpu.memory_space<vmem>>, %arg5: memref<1x1x256xf32, #tpu.memory_space<vmem>>) attributes {dimension_semantics = [#tpu.dimension_semantics<parallel>, #tpu.dimension_semantics<arbitrary>], iteration_bounds = array<i64: 2, 1>, scalar_prefetch = 0 : i64, scratch_operands = 0 : i64, tpu.core_type = #tpu.core_type<tc>, window_params = [{transform_indices = @transform_0, window_bounds = array<i64: 1, 256, 4>}, {transform_indices = @transform_1, window_bounds = array<i64: 1, 4, 256>}, {transform_indices = @transform_2, window_bounds = array<i64: 1, 256, 256>}, {transform_indices = @transform_3, window_bounds = array<i64: 1, 1, 256>}]} {
    %c0_i32 = arith.constant 0 : i32
    %0 = arith.cmpi eq, %arg1, %c0_i32 : i32
    %1 = arith.extui %0 : i1 to i32
    %c0_i32_0 = arith.constant 0 : i32
    %2 = arith.cmpi ne, %1, %c0_i32_0 : i32
    scf.if %2 {
      %cst_17 = arith.constant 0.000000e+00 : f32
      %22 = vector.broadcast %cst_17 : f32 to vector<1x256xf32>
      %c0_18 = arith.constant 0 : index
      %c0_19 = arith.constant 0 : index
      %c0_20 = arith.constant 0 : index
      %23 = vector.load %arg5[%c0_18, %c0_19, %c0_20] : memref<1x1x256xf32, #tpu.memory_space<vmem>>, vector<1x1x256xf32>
      %24 = vector.shape_cast %23 : vector<1x1x256xf32> to vector<1x256xf32>
      %25 = vector.shape_cast %22 : vector<1x256xf32> to vector<1x1x256xf32>
      tpu.vector_store %arg5[%c0_18, %c0_19, %c0_20], %25 {strides = array<i32>} : memref<1x1x256xf32, #tpu.memory_space<vmem>>, vector<1x1x256xf32>,
    } else {
    }
    %c0 = arith.constant 0 : index
    %c0_1 = arith.constant 0 : index
    %c0_2 = arith.constant 0 : index
    %3 = vector.load %arg2[%c0, %c0_1, %c0_2] : memref<1x256x4xf32, #tpu.memory_space<vmem>>, vector<1x256x4xf32>
    %4 = vector.shape_cast %3 : vector<1x256x4xf32> to vector<256x4xf32>
    %c0_3 = arith.constant 0 : index
    %c0_4 = arith.constant 0 : index
    %c0_5 = arith.constant 0 : index
    %5 = vector.load %arg3[%c0_3, %c0_4, %c0_5] : memref<1x4x256xf32, #tpu.memory_space<vmem>>, vector<1x4x256xf32>
    %6 = vector.shape_cast %5 : vector<1x4x256xf32> to vector<4x256xf32>
    %cst = arith.constant dense<0.000000e+00> : vector<256x256xf32>
    %7 = tpu.matmul %4, %6, %cst {dimension_numbers = #tpu.dot_dimension_numbers<[1], [0], [0], [1], [0, 0, 1, 1], [], []>} : vector<256x4xf32>, vector<4x256xf32>, vector<256x256xf32> -> vector<256x256xf32>
    %cst_6 = arith.constant 0.000000e+00 : f32
    %8 = vector.broadcast %cst_6 : f32 to vector<256x256xf32>
    %9 = arith.maximumf %7, %8 : vector<256x256xf32>
    %c0_7 = arith.constant 0 : index
    %c0_8 = arith.constant 0 : index
    %c0_9 = arith.constant 0 : index
    %10 = vector.load %arg5[%c0_7, %c0_8, %c0_9] : memref<1x1x256xf32, #tpu.memory_space<vmem>>, vector<1x1x256xf32>
    %11 = vector.shape_cast %10 : vector<1x1x256xf32> to vector<1x256xf32>
    %12 = arith.mulf %9, %9 : vector<256x256xf32>
    %cst_10 = arith.constant dense<0.000000e+00> : vector<256xf32>
    %13 = vector.multi_reduction <add>, %12, %cst_10 [0] : vector<256x256xf32> to vector<256xf32>
    %14 = vector.shape_cast %13 : vector<256xf32> to vector<1x256xf32>
    %15 = arith.addf %11, %14 : vector<1x256xf32>
    %c0_11 = arith.constant 0 : index
    %c0_12 = arith.constant 0 : index
    %c0_13 = arith.constant 0 : index
    %16 = vector.load %arg5[%c0_11, %c0_12, %c0_13] : memref<1x1x256xf32, #tpu.memory_space<vmem>>, vector<1x1x256xf32>
    %17 = vector.shape_cast %16 : vector<1x1x256xf32> to vector<1x256xf32>
    %18 = vector.shape_cast %15 : vector<1x256xf32> to vector<1x1x256xf32>
    tpu.vector_store %arg5[%c0_11, %c0_12, %c0_13], %18 {strides = array<i32>} : memref<1x1x256xf32, #tpu.memory_space<vmem>>, vector<1x1x256xf32>,
    %c0_14 = arith.constant 0 : index
    %c0_15 = arith.constant 0 : index
    %c0_16 = arith.constant 0 : index
    %19 = vector.load %arg4[%c0_14, %c0_15, %c0_16] : memref<1x256x256xf32, #tpu.memory_space<vmem>>, vector<1x256x256xf32>
    %20 = vector.shape_cast %19 : vector<1x256x256xf32> to vector<256x256xf32>
    %21 = vector.shape_cast %9 : vector<256x256xf32> to vector<1x256x256xf32>
    tpu.vector_store %arg4[%c0_14, %c0_15, %c0_16], %21 {strides = array<i32>} : memref<1x256x256xf32, #tpu.memory_space<vmem>>, vector<1x256x256xf32>,
    return
  }
  func.func @transform_0(%arg0: i32, %arg1: i32) -> (i32, i32, i32) {
    %c0_i32 = arith.constant 0 : i32
    %c0_i32_0 = arith.constant 0 : i32
    return %arg0, %arg1, %c0_i32 : i32, i32, i32
  }
  func.func @transform_1(%arg0: i32, %arg1: i32) -> (i32, i32, i32) {
    %c0_i32 = arith.constant 0 : i32
    %c0_i32_0 = arith.constant 0 : i32
    %c0_i32_1 = arith.constant 0 : i32
    return %arg0, %c0_i32, %c0_i32_0 : i32, i32, i32
  }
  func.func @transform_2(%arg0: i32, %arg1: i32) -> (i32, i32, i32) {
    %c0_i32 = arith.constant 0 : i32
    %c0_i32_0 = arith.constant 0 : i32
    return %arg0, %arg1, %c0_i32 : i32, i32, i32
  }
  func.func @transform_3(%arg0: i32, %arg1: i32) -> (i32, i32, i32) {
    %c0_i32 = arith.constant 0 : i32
    %c0_i32_0 = arith.constant 0 : i32
    %c0_i32_1 = arith.constant 0 : i32
    return %arg0, %c0_i32, %c0_i32_0 : i32, i32, i32
  }
}

</mosaic_0001>

<llo_original>
// kernel: tpu_custom_call.1
$region0: #{tpu_custom_call.1}
  #allocation0 [shape = 'u32[]', space=smem, size = 0x4, offset = 0x4, fixed_abs, tag = 'smem constant byte address 0x4 - core index']
  #allocation1 [shape = 'u32[144,128]{1,0:T(1,128)}', space=vmem, size = 0x12000, scoped, tag = 'internal scratch']
  %s0 = inlined_call_operand.vmem [shape: f32[2,256,4], index: 0, kind: input, shape index: {}]
  %s1 = inlined_call_operand.vmem [shape: f32[2,4,256], index: 1, kind: input, shape index: {}]
  %s2 = inlined_call_operand.hbm [shape: f32[2,256,256], index: 2, kind: output, shape index: {0}]
  %s3 = inlined_call_operand.hbm [shape: f32[2,1,256], index: 3, kind: output, shape index: {1}]
  %4 = xla_tuple %s2, %s3
  %s5 = sld [smem:[#allocation0]]
  $region53: #{tpu_custom_call.1} parent=0
    _
  %s7 = ssub.s32 1, %s5
  %s8 = scalar_select 0, %s7, %s5
  $region1: #{tpu_custom_call.1} parent=0
    #allocation2 [shape = 'u8[524288]{0}', space=vmem, size = 0x80000, scoped, tag = 'output window, operand 0']
    #allocation3 [shape = 's32[2]{0}', space=sflag, size = 0x8, scoped, tag = 'scoped memory for tpu_custom_call.1']
    #allocation4 [shape = 'u8[2048]{0}', space=vmem, size = 0x800, scoped, tag = 'output window, operand 1']
    #allocation5 [shape = 's32[2]{0}', space=sflag, size = 0x8, scoped, tag = 'scoped memory for tpu_custom_call.1']
    %9 = vsyncpa [#allocation3], 0
    %s10 = scalar_lea.sflag [#allocation3], 1
    %11 = vsyncpa %s10, 0
    %12 = vsyncpa [#allocation5], 0
    %s13 = scalar_lea.sflag [#allocation5], 1
    %14 = vsyncpa %s13, 0
    loop: start=0, step=1, limit=4
    $region2: #{tpu_custom_call.1} parent=1 // loop_pre_header
      _
    $region3: #{tpu_custom_call.1} parent=1 // loop_header
      %s16 = sphi 0, %s20
      %p17 = scmp.ge.s32.totalorder %s16, 4
      %s23 = sphi 0, %s35
      %s24 = sphi 0, %s31
      %s25 = sphi 0, %s23
      %s26 = sphi 0, %s24
      %s27 = sphi 0, %s25
      %s28 = sphi 0, %s26
      %s40 = sphi 0, %s42
      %s43 = sphi 0, %s40
      %s44 = sphi 0, %s43
      %s60 = sphi 0, %s44
      %s66 = sphi 0, %s68
      %s69 = sphi 0, %s66
      %s70 = sphi 0, %s69
      %s86 = sphi 0, %s70
      %s94 = sphi 0, %s96
      %s97 = sphi 0, %s94
      %s98 = sphi 0, %s97
      %s114 = sphi 0, %s98
      %s120 = sphi 0, %s122
      %s123 = sphi 0, %s120
      %s124 = sphi 0, %s123
      %s140 = sphi 0, %s124
    $region4: #{tpu_custom_call.1} parent=1 // loop_header_branch
      %19 = sbr.rel (%p17) target = $region8
    $region5: #{tpu_custom_call.1} parent=1 // loop_body
      %s21 = ssub.s32 %s16, 1
      %s22 = ssub.s32 %s16, 2
      %s29 = sadd.s32 1, %s24
      %p30 = scmp.ge.s32.totalorder %s29, 1
      %s31 = scalar_select %p30, 0, %s29
      %s32 = sadd.s32 1, %s23
      %s33 = scalar_select %p30, %s32, %s23
      %p34 = scmp.ge.s32.totalorder %s33, 2
      %s35 = scalar_select %p34, 0, %s33
      %s36 = ssub.s32 %s23, %s35
      %s37 = ssub.s32 %s24, %s31
      %s38 = sor.u32 %s36, %s37
      %p39 = scmp.eq.s32.totalorder %s38, 0
      %s41 = sadd.s32 %s40, 1
      %s42 = scalar_select %p39, %s40, %s41
      %p45 = pneg %p39
      %p46 = scmp.eq.s32.totalorder %s16, 1
      %p47 = por %p45, %p46
      %p48 = scmp.ne.s32.totalorder %s40, %s43
      %p49 = scmp.eq.s32.totalorder %s16, 0
      %p50 = por %p48, %p49
      %p51 = scmp.ne.s32.totalorder %s40, %s43
      %p52 = scmp.eq.s32.totalorder %s21, 1
      %p53 = por %p51, %p52
      %p54 = scmp.ne.s32.totalorder %s43, %s44
      %p55 = scmp.eq.s32.totalorder %s21, 0
      %p56 = por %p54, %p55
      %p57 = scmp.ne.s32.totalorder %s43, %s44
      %p58 = scmp.eq.s32.totalorder %s22, 1
      %p59 = por %p57, %p58
      %p61 = scmp.ne.s32.totalorder %s44, %s60
      %p62 = scmp.eq.s32.totalorder %s22, 0
      %p63 = por %p61, %p62
      %s64 = ssub.s32 %s23, %s35
      %p65 = scmp.eq.s32.totalorder %s64, 0
      %s67 = sadd.s32 %s66, 1
      %s68 = scalar_select %p65, %s66, %s67
      %p71 = pneg %p65
      %p72 = scmp.eq.s32.totalorder %s16, 1
      %p73 = por %p71, %p72
      %p74 = scmp.ne.s32.totalorder %s66, %s69
      %p75 = scmp.eq.s32.totalorder %s16, 0
      %p76 = por %p74, %p75
      %p77 = scmp.ne.s32.totalorder %s66, %s69
      %p78 = scmp.eq.s32.totalorder %s21, 1
      %p79 = por %p77, %p78
      %p80 = scmp.ne.s32.totalorder %s69, %s70
      %p81 = scmp.eq.s32.totalorder %s21, 0
      %p82 = por %p80, %p81
      %p83 = scmp.ne.s32.totalorder %s69, %s70
      %p84 = scmp.eq.s32.totalorder %s22, 1
      %p85 = por %p83, %p84
      %p87 = scmp.ne.s32.totalorder %s70, %s86
      %p88 = scmp.eq.s32.totalorder %s22, 0
      %p89 = por %p87, %p88
      %s90 = ssub.s32 %s23, %s35
      %s91 = ssub.s32 %s24, %s31
      %s92 = sor.u32 %s90, %s91
      %p93 = scmp.eq.s32.totalorder %s92, 0
      %s95 = sadd.s32 %s94, 1
      %s96 = scalar_select %p93, %s94, %s95
      %p99 = pneg %p93
      %p100 = scmp.eq.s32.totalorder %s16, 1
      %p101 = por %p99, %p100
      %p102 = scmp.ne.s32.totalorder %s94, %s97
      %p103 = scmp.eq.s32.totalorder %s16, 0
      %p104 = por %p102, %p103
      %p105 = scmp.ne.s32.totalorder %s94, %s97
      %p106 = scmp.eq.s32.totalorder %s21, 1
      %p107 = por %p105, %p106
      %p108 = scmp.ne.s32.totalorder %s97, %s98
      %p109 = scmp.eq.s32.totalorder %s21, 0
      %p110 = por %p108, %p109
      %p111 = scmp.ne.s32.totalorder %s97, %s98
      %p112 = scmp.eq.s32.totalorder %s22, 1
      %p113 = por %p111, %p112
      %p115 = scmp.ne.s32.totalorder %s98, %s114
      %p116 = scmp.eq.s32.totalorder %s22, 0
      %p117 = por %p115, %p116
      %s118 = ssub.s32 %s23, %s35
      %p119 = scmp.eq.s32.totalorder %s118, 0
      %s121 = sadd.s32 %s120, 1
      %s122 = scalar_select %p119, %s120, %s121
      %p125 = pneg %p119
      %p126 = scmp.eq.s32.totalorder %s16, 1
      %p127 = por %p125, %p126
      %p128 = scmp.ne.s32.totalorder %s120, %s123
      %p129 = scmp.eq.s32.totalorder %s16, 0
      %p130 = por %p128, %p129
      %p131 = scmp.ne.s32.totalorder %s120, %s123
      %p132 = scmp.eq.s32.totalorder %s21, 1
      %p133 = por %p131, %p132
      %p134 = scmp.ne.s32.totalorder %s123, %s124
      %p135 = scmp.eq.s32.totalorder %s21, 0
      %p136 = por %p134, %p135
      %p137 = scmp.ne.s32.totalorder %s123, %s124
      %p138 = scmp.eq.s32.totalorder %s22, 1
      %p139 = por %p137, %p138
      %p141 = scmp.ne.s32.totalorder %s124, %s140
      %p142 = scmp.eq.s32.totalorder %s22, 0
      %p143 = por %p141, %p142
      %p144 = scmp.le.s32.totalorder 1, %s16
      %p145 = scmp.lt.s32.totalorder %s16, 3
      %p146 = pnand %p144, %p145
      %p147 = pneg %p146
      // Predicated region
      $region9: #{tpu_custom_call.1} parent=5 // pred_check
        _
      $region10: #{tpu_custom_call.1} parent=5 // pred_check_branch
        %149 = sbr.rel (%p146) target = $region12
      $region11: #{tpu_custom_call.1} parent=5 // pred_region
        %s150 = ssub.s32 %s16, 1
      $region12: #{tpu_custom_call.1} parent=5 // pred_fallthru
        _
      %p151 = scmp.lt.s32.totalorder %s16, 2
      // Predicated region
      $region13: #{tpu_custom_call.1} parent=5 // pred_check
        %p152 = pneg %p151
      $region14: #{tpu_custom_call.1} parent=5 // pred_check_branch
        %154 = sbr.rel (%p152) target = $region16
      $region15: #{tpu_custom_call.1} parent=5 // pred_region
        // Predicated region
        $region17: #{tpu_custom_call.1} parent=15 // pred_check
          %p155 = pneg %p50
        $region18: #{tpu_custom_call.1} parent=15 // pred_check_branch
          %157 = sbr.rel (%p155) target = $region20
        $region19: #{tpu_custom_call.1} parent=15 // pred_region
          %s158 = smul.u32 32, %s24
          %p159 = scmp.lt.s32.totalorder %s23, 1
          %s160 = scalar_select %p159, %s23, 1
          %p161 = scmp.lt.s32.totalorder %s158, 31
          %s162 = scalar_select %p161, %s158, 31
          %s163 = smul.addr %s160, 32
          %s164 = sadd.s32 %s162, %s163
          %s165 = smul.addr %s164, 8
          %s166 = scalar_lea.vmem %s0, %s165
          %s167 = smul.u32 32, %s24
        $region20: #{tpu_custom_call.1} parent=15 // pred_fallthru
          _
        // Predicated region
        $region21: #{tpu_custom_call.1} parent=15 // pred_check
          %p168 = pneg %p76
        $region22: #{tpu_custom_call.1} parent=15 // pred_check_branch
          %170 = sbr.rel (%p168) target = $region24
        $region23: #{tpu_custom_call.1} parent=15 // pred_region
          %p171 = scmp.lt.s32.totalorder %s23, 1
          %s172 = scalar_select %p171, %s23, 1
          %s173 = smul.addr %s172, 2
          %s174 = smul.addr %s173, 4
          %s175 = scalar_lea.vmem %s1, %s174
        $region24: #{tpu_custom_call.1} parent=15 // pred_fallthru
          _
      $region16: #{tpu_custom_call.1} parent=5 // pred_fallthru
        _
      %p176 = scmp.le.s32.totalorder 1, %s16
      %p177 = scmp.lt.s32.totalorder %s16, 3
      %p178 = pnand %p176, %p177
      %p179 = pneg %p178
      // Predicated region
      $region25: #{tpu_custom_call.1} parent=5 // pred_check
        _
      $region26: #{tpu_custom_call.1} parent=5 // pred_check_branch
        %181 = sbr.rel (%p178) target = $region28
      $region27: #{tpu_custom_call.1} parent=5 // pred_region
        %s182 = ssub.s32 %s16, 1
        %s183 = smul.u32 32, %s26
        %p184 = scmp.lt.s32.totalorder %s25, 1
        %s185 = scalar_select %p184, %s25, 1
        %p186 = scmp.lt.s32.totalorder %s183, 31
        %s187 = scalar_select %p186, %s183, 31
        %s188 = smul.addr %s185, 32
        %s189 = sadd.s32 %s187, %s188
        %s190 = smul.addr %s189, 8
        %s191 = scalar_lea.vmem %s0, %s190
        %p192 = pneg %p56
        %p193 = pneg %p53
        %p194 = scmp.lt.s32.totalorder %s25, 1
        %s195 = scalar_select %p194, %s25, 1
        %s196 = smul.addr %s195, 2
        %s197 = smul.addr %s196, 4
        %s198 = scalar_lea.vmem %s1, %s197
        %p199 = pneg %p82
        %p200 = pneg %p79
        %p201 = pneg %p110
        %p202 = pneg %p107
        %s203 = sand.u32 %s97, 1
        %s204 = scalar_lea.sflag [#allocation3], %s203
        %s205 = sand.u32 %s97, 1
        %s206 = smul.addr %s205, 512
        %s207 = scalar_lea.vmem [#allocation2], %s206
        %p208 = pneg %p136
        %p209 = pneg %p133
        %s210 = sand.u32 %s123, 1
        %s211 = scalar_lea.sflag [#allocation5], %s210
        %s212 = sand.u32 %s123, 1
        %s213 = smul.addr %s212, 2
        %s214 = scalar_lea.vmem [#allocation4], %s213
        %s215 = smul.u32 32, %s26
        %p216 = scmp.lt.s32.totalorder %s25, 1
        %s217 = scalar_select %p216, %s25, 1
        %p218 = scmp.lt.s32.totalorder %s215, 31
        %s219 = scalar_select %p218, %s215, 31
        %s220 = smul.addr %s217, 32
        %s221 = sadd.s32 %s219, %s220
        %s222 = smul.addr %s221, 8
        %s223 = scalar_lea.vmem %s0, %s222
        %s224 = smul.u32 32, %s26
        %p225 = scmp.lt.s32.totalorder %s25, 1
        %s226 = scalar_select %p225, %s25, 1
        %s227 = smul.addr %s226, 2
        %s228 = smul.addr %s227, 4
        %s229 = scalar_lea.vmem %s1, %s228
        %s230 = smul.u32 32, %s26
        %p231 = scmp.eq.s32.totalorder %s26, 0
        // Predicated region
        $region29: #{tpu_custom_call.1} parent=27 // pred_check
          %p232 = pneg %p231
        $region30: #{tpu_custom_call.1} parent=27 // pred_check_branch
          %234 = sbr.rel (%p232) target = $region32
        $region31: #{tpu_custom_call.1} parent=27 // pred_region
          %v235 = vlaneseq
          %vm236 = vcmp.ge.s32.totalorder %v235, 0
          %vm237 = vcmp.lt.s32.totalorder %v235, 256
          %vm238 = vmand %vm236, %vm237
          %239 = vst.msk [vmem:[%s214] sm:$0x3] %vm238, 0.0
        $region32: #{tpu_custom_call.1} parent=27 // pred_fallthru
          _
        %v240 = vld [vmem:[%s223] sm:$0xff]
        %v241 = vld [vmem:[%s223 + $0x8] sm:$0xff]
        %v242 = vld [vmem:[%s223 + $0x10] sm:$0xff]
        %v243 = vld [vmem:[%s223 + $0x18] sm:$0xff]
        %v244 = vld [vmem:[%s223 + $0x20] sm:$0xff]
        %v245 = vld [vmem:[%s223 + $0x28] sm:$0xff]
        %v246 = vld [vmem:[%s223 + $0x30] sm:$0xff]
        %v247 = vld [vmem:[%s223 + $0x38] sm:$0xff]
        %v248 = vld [vmem:[%s223 + $0x40] sm:$0xff]
        %v249 = vld [vmem:[%s223 + $0x48] sm:$0xff]
        %v250 = vld [vmem:[%s223 + $0x50] sm:$0xff]
        %v251 = vld [vmem:[%s223 + $0x58] sm:$0xff]
        %v252 = vld [vmem:[%s223 + $0x60] sm:$0xff]
        %v253 = vld [vmem:[%s223 + $0x68] sm:$0xff]
        %v254 = vld [vmem:[%s223 + $0x70] sm:$0xff]
        %v255 = vld [vmem:[%s223 + $0x78] sm:$0xff]
        %v256 = vld [vmem:[%s223 + $0x80] sm:$0xff]
        %v257 = vld [vmem:[%s223 + $0x88] sm:$0xff]
        %v258 = vld [vmem:[%s223 + $0x90] sm:$0xff]
        %v259 = vld [vmem:[%s223 + $0x98] sm:$0xff]
        %v260 = vld [vmem:[%s223 + $0xa0] sm:$0xff]
        %v261 = vld [vmem:[%s223 + $0xa8] sm:$0xff]
        %v262 = vld [vmem:[%s223 + $0xb0] sm:$0xff]
        %v263 = vld [vmem:[%s223 + $0xb8] sm:$0xff]
        %v264 = vld [vmem:[%s223 + $0xc0] sm:$0xff]
        %v265 = vld [vmem:[%s223 + $0xc8] sm:$0xff]
        %v266 = vld [vmem:[%s223 + $0xd0] sm:$0xff]
        %v267 = vld [vmem:[%s223 + $0xd8] sm:$0xff]
        %v268 = vld [vmem:[%s223 + $0xe0] sm:$0xff]
        %v269 = vld [vmem:[%s223 + $0xe8] sm:$0xff]
        %v270 = vld [vmem:[%s223 + $0xf0] sm:$0xff]
        %v271 = vld [vmem:[%s223 + $0xf8] sm:$0xff]
        %v272 = vld [vmem:[%s229] sm:$0xff]
        %v274 = vcombine.high %v272, %v272
        %vm275 = vcmask 31744
        %v277 = vsel %vm275, %v240, 0
        %v280 = vsel %vm275, %v241, 0
        %v283 = vsel %vm275, %v242, 0
        %v286 = vsel %vm275, %v243, 0
        %v289 = vsel %vm275, %v244, 0
        %v292 = vsel %vm275, %v245, 0
        %v295 = vsel %vm275, %v246, 0
        %v298 = vsel %vm275, %v247, 0
        %v301 = vsel %vm275, %v248, 0
        %v304 = vsel %vm275, %v249, 0
        %v307 = vsel %vm275, %v250, 0
        %v310 = vsel %vm275, %v251, 0
        %v313 = vsel %vm275, %v252, 0
        %v316 = vsel %vm275, %v253, 0
        %v319 = vsel %vm275, %v254, 0
        %v322 = vsel %vm275, %v255, 0
        %v325 = vsel %vm275, %v256, 0
        %v328 = vsel %vm275, %v257, 0
        %v331 = vsel %vm275, %v258, 0
        %v334 = vsel %vm275, %v259, 0
        %v337 = vsel %vm275, %v260, 0
        %v340 = vsel %vm275, %v261, 0
        %v343 = vsel %vm275, %v262, 0
        %v346 = vsel %vm275, %v263, 0
        %v349 = vsel %vm275, %v264, 0
        %v352 = vsel %vm275, %v265, 0
        %v355 = vsel %vm275, %v266, 0
        %v358 = vsel %vm275, %v267, 0
        %v361 = vsel %vm275, %v268, 0
        %v364 = vsel %vm275, %v269, 0
        %v367 = vsel %vm275, %v270, 0
        %v370 = vsel %vm275, %v271, 0
        %vm372 = vcmask 1043456
        %v373 = vsel %vm372, %v272, 0
        %v375 = vsel %vm372, %v274, 0
        %377 = vmatprep.subr.mxu0 %v375
        %378 = vmatpush1.msra.mxu0 %v373
        %379 = vmatprep.subr.mxu0 0.0
        %380 = vmatpush1.msra.mxu0 0.0
        %381 = vmatprep.subr.mxu0 0.0
        %382 = vmatpush1.msra.mxu0 0.0
        %383 = vmatprep.subr.mxu0 0.0
        %384 = vmatpush1.msra.mxu0 0.0
        %385 = vmatprep.subr.mxu0 0.0
        %386 = vmatpush1.msra.mxu0 0.0
        %387 = vmatprep.subr.mxu0 0.0
        %388 = vmatpush1.msra.mxu0 0.0
        %389 = vmatprep.subr.mxu0 0.0
        %390 = vmatpush1.msra.mxu0 0.0
        %391 = vmatprep.subr.mxu0 0.0
        %392 = vmatpush1.msra.mxu0 0.0
        %393 = vmatprep.subr.mxu0 0.0
        %394 = vmatpush1.msra.mxu0 0.0
        %395 = vmatprep.subr.mxu0 0.0
        %396 = vmatpush1.msra.mxu0 0.0
        %397 = vmatprep.subr.mxu0 0.0
        %398 = vmatpush1.msra.mxu0 0.0
        %399 = vmatprep.subr.mxu0 0.0
        %400 = vmatpush1.msra.mxu0 0.0
        %401 = vmatprep.subr.mxu0 0.0
        %402 = vmatpush1.msra.mxu0 0.0
        %403 = vmatprep.subr.mxu0 0.0
        %404 = vmatpush1.msra.mxu0 0.0
        %405 = vmatprep.subr.mxu0 0.0
        %406 = vmatpush1.msra.mxu0 0.0
        %407 = vmatprep.subr.mxu0 0.0
        %408 = vmatpush1.msra.mxu0 0.0
        %409 = vmatprep.subr.mxu0 0.0
        %410 = vmatpush1.msra.mxu0 0.0
        %411 = vmatprep.subr.mxu0 0.0
        %412 = vmatpush1.msra.mxu0 0.0
        %413 = vmatprep.subr.mxu0 0.0
        %414 = vmatpush1.msra.mxu0 0.0
        %415 = vmatprep.subr.mxu0 0.0
        %416 = vmatpush1.msra.mxu0 0.0
        %417 = vmatprep.subr.mxu0 0.0
        %418 = vmatpush1.msra.mxu0 0.0
        %419 = vmatprep.subr.mxu0 0.0
        %420 = vmatpush1.msra.mxu0 0.0
        %421 = vmatprep.subr.mxu0 0.0
        %422 = vmatpush1.msra.mxu0 0.0
        %423 = vmatprep.subr.mxu0 0.0
        %424 = vmatpush1.msra.mxu0 0.0
        %425 = vmatprep.subr.mxu0 0.0
        %426 = vmatpush1.msra.mxu0 0.0
        %427 = vmatprep.subr.mxu0 0.0
        %428 = vmatpush1.msra.mxu0 0.0
        %429 = vmatprep.subr.mxu0 0.0
        %430 = vmatpush1.msra.mxu0 0.0
        %431 = vmatprep.subr.mxu0 0.0
        %432 = vmatpush1.msra.mxu0 0.0
        %433 = vmatprep.subr.mxu0 0.0
        %434 = vmatpush1.msra.mxu0 0.0
        %435 = vmatprep.subr.mxu0 0.0
        %436 = vmatpush1.msra.mxu0 0.0
        %437 = vmatprep.subr.mxu0 0.0
        %438 = vmatpush1.msra.mxu0 0.0
        %439 = vmatprep.subr.mxu0 0.0
        %440 = vmatpush1.msra.mxu0 0.0
        %441 = vmatprep.mubr.f32.mxu0 0.0
        %442 = vmatmul.mubr.f32.gmra.mrb[0].mxu0 %v277
        %v443 = vpop.f32.mrb[0].mxu0
        %v444 = vadd.f32 0.0, %v443
        %v445 = vpop.f32.mrb[0].mxu0
        %v446 = vadd.f32 0.0, %v445
        %447 = vmatprep.mubr.f32.mxu0 0.0
        %448 = vmatmul.mubr.f32.gmra.mrb[0].mxu0 %v280
        %v449 = vpop.f32.mrb[0].mxu0
        %v450 = vadd.f32 0.0, %v449
        %v451 = vpop.f32.mrb[0].mxu0
        %v452 = vadd.f32 0.0, %v451
        %453 = vmatprep.mubr.f32.mxu0 0.0
        %454 = vmatmul.mubr.f32.gmra.mrb[0].mxu0 %v283
        %v455 = vpop.f32.mrb[0].mxu0
        %v456 = vadd.f32 0.0, %v455
        %v457 = vpop.f32.mrb[0].mxu0
        %v458 = vadd.f32 0.0, %v457
        %459 = vmatprep.mubr.f32.mxu0 0.0
        %460 = vmatmul.mubr.f32.gmra.mrb[0].mxu0 %v286
        %v461 = vpop.f32.mrb[0].mxu0
        %v462 = vadd.f32 0.0, %v461
        %v463 = vpop.f32.mrb[0].mxu0
        %v464 = vadd.f32 0.0, %v463
        %465 = vmatprep.mubr.f32.mxu0 0.0
        %466 = vmatmul.mubr.f32.gmra.mrb[0].mxu0 %v289
        %v467 = vpop.f32.mrb[0].mxu0
        %v468 = vadd.f32 0.0, %v467
        %v469 = vpop.f32.mrb[0].mxu0
        %v470 = vadd.f32 0.0, %v469
        %471 = vmatprep.mubr.f32.mxu0 0.0
        %472 = vmatmul.mubr.f32.gmra.mrb[0].mxu0 %v292
        %v473 = vpop.f32.mrb[0].mxu0
        %v474 = vadd.f32 0.0, %v473
        %v475 = vpop.f32.mrb[0].mxu0
        %v476 = vadd.f32 0.0, %v475
        %477 = vmatprep.mubr.f32.mxu0 0.0
        %478 = vmatmul.mubr.f32.gmra.mrb[0].mxu0 %v295
        %v479 = vpop.f32.mrb[0].mxu0
        %v480 = vadd.f32 0.0, %v479
        %v481 = vpop.f32.mrb[0].mxu0
        %v482 = vadd.f32 0.0, %v481
        %483 = vmatprep.mubr.f32.mxu0 0.0
        %484 = vmatmul.mubr.f32.gmra.mrb[0].mxu0 %v298
        %v485 = vpop.f32.mrb[0].mxu0
        %v486 = vadd.f32 0.0, %v485
        %v487 = vpop.f32.mrb[0].mxu0
        %v488 = vadd.f32 0.0, %v487
        %489 = vmatprep.mubr.f32.mxu0 0.0
        %490 = vmatmul.mubr.f32.gmra.mrb[0].mxu0 %v301
        %v491 = vpop.f32.mrb[0].mxu0
        %v492 = vadd.f32 0.0, %v491
        %v493 = vpop.f32.mrb[0].mxu0
        %v494 = vadd.f32 0.0, %v493
        %495 = vmatprep.mubr.f32.mxu0 0.0
        %496 = vmatmul.mubr.f32.gmra.mrb[0].mxu0 %v304
        %v497 = vpop.f32.mrb[0].mxu0
        %v498 = vadd.f32 0.0, %v497
        %v499 = vpop.f32.mrb[0].mxu0
        %v500 = vadd.f32 0.0, %v499
        %501 = vmatprep.mubr.f32.mxu0 0.0
        %502 = vmatmul.mubr.f32.gmra.mrb[0].mxu0 %v307
        %v503 = vpop.f32.mrb[0].mxu0
        %v504 = vadd.f32 0.0, %v503
        %v505 = vpop.f32.mrb[0].mxu0
        %v506 = vadd.f32 0.0, %v505
        %507 = vmatprep.mubr.f32.mxu0 0.0
        %508 = vmatmul.mubr.f32.gmra.mrb[0].mxu0 %v310
        %v509 = vpop.f32.mrb[0].mxu0
        %v510 = vadd.f32 0.0, %v509
        %v511 = vpop.f32.mrb[0].mxu0
        %v512 = vadd.f32 0.0, %v511
        %513 = vmatprep.mubr.f32.mxu0 0.0
        %514 = vmatmul.mubr.f32.gmra.mrb[0].mxu0 %v313
        %v515 = vpop.f32.mrb[0].mxu0
        %v516 = vadd.f32 0.0, %v515
        %v517 = vpop.f32.mrb[0].mxu0
        %v518 = vadd.f32 0.0, %v517
        %519 = vmatprep.mubr.f32.mxu0 0.0
        %520 = vmatmul.mubr.f32.gmra.mrb[0].mxu0 %v316
        %v521 = vpop.f32.mrb[0].mxu0
        %v522 = vadd.f32 0.0, %v521
        %v523 = vpop.f32.mrb[0].mxu0
        %v524 = vadd.f32 0.0, %v523
        %525 = vmatprep.mubr.f32.mxu0 0.0
        %526 = vmatmul.mubr.f32.gmra.mrb[0].mxu0 %v319
        %v527 = vpop.f32.mrb[0].mxu0
        %v528 = vadd.f32 0.0, %v527
        %v529 = vpop.f32.mrb[0].mxu0
        %v530 = vadd.f32 0.0, %v529
        %531 = vmatprep.mubr.f32.mxu0 0.0
        %532 = vmatmul.mubr.f32.gmra.mrb[0].mxu0 %v322
        %v533 = vpop.f32.mrb[0].mxu0
        %v534 = vadd.f32 0.0, %v533
        %v535 = vpop.f32.mrb[0].mxu0
        %v536 = vadd.f32 0.0, %v535
        %537 = vmatprep.mubr.f32.mxu0 0.0
        %538 = vmatmul.mubr.f32.gmra.mrb[0].mxu0 %v325
        %v539 = vpop.f32.mrb[0].mxu0
        %v540 = vadd.f32 0.0, %v539
        %v541 = vpop.f32.mrb[0].mxu0
        %v542 = vadd.f32 0.0, %v541
        %543 = vmatprep.mubr.f32.mxu0 0.0
        %544 = vmatmul.mubr.f32.gmra.mrb[0].mxu0 %v328
        %v545 = vpop.f32.mrb[0].mxu0
        %v546 = vadd.f32 0.0, %v545
        %v547 = vpop.f32.mrb[0].mxu0
        %v548 = vadd.f32 0.0, %v547
        %549 = vmatprep.mubr.f32.mxu0 0.0
        %550 = vmatmul.mubr.f32.gmra.mrb[0].mxu0 %v331
        %v551 = vpop.f32.mrb[0].mxu0
        %v552 = vadd.f32 0.0, %v551
        %v553 = vpop.f32.mrb[0].mxu0
        %v554 = vadd.f32 0.0, %v553
        %555 = vmatprep.mubr.f32.mxu0 0.0
        %556 = vmatmul.mubr.f32.gmra.mrb[0].mxu0 %v334
        %v557 = vpop.f32.mrb[0].mxu0
        %v558 = vadd.f32 0.0, %v557
        %v559 = vpop.f32.mrb[0].mxu0
        %v560 = vadd.f32 0.0, %v559
        %561 = vmatprep.mubr.f32.mxu0 0.0
        %562 = vmatmul.mubr.f32.gmra.mrb[0].mxu0 %v337
        %v563 = vpop.f32.mrb[0].mxu0
        %v564 = vadd.f32 0.0, %v563
        %v565 = vpop.f32.mrb[0].mxu0
        %v566 = vadd.f32 0.0, %v565
        %567 = vmatprep.mubr.f32.mxu0 0.0
        %568 = vmatmul.mubr.f32.gmra.mrb[0].mxu0 %v340
        %v569 = vpop.f32.mrb[0].mxu0
        %v570 = vadd.f32 0.0, %v569
        %v571 = vpop.f32.mrb[0].mxu0
        %v572 = vadd.f32 0.0, %v571
        %573 = vmatprep.mubr.f32.mxu0 0.0
        %574 = vmatmul.mubr.f32.gmra.mrb[0].mxu0 %v343
        %v575 = vpop.f32.mrb[0].mxu0
        %v576 = vadd.f32 0.0, %v575
        %v577 = vpop.f32.mrb[0].mxu0
        %v578 = vadd.f32 0.0, %v577
        %579 = vmatprep.mubr.f32.mxu0 0.0
        %580 = vmatmul.mubr.f32.gmra.mrb[0].mxu0 %v346
        %v581 = vpop.f32.mrb[0].mxu0
        %v582 = vadd.f32 0.0, %v581
        %v583 = vpop.f32.mrb[0].mxu0
        %v584 = vadd.f32 0.0, %v583
        %585 = vmatprep.mubr.f32.mxu0 0.0
        %586 = vmatmul.mubr.f32.gmra.mrb[0].mxu0 %v349
        %v587 = vpop.f32.mrb[0].mxu0
        %v588 = vadd.f32 0.0, %v587
        %v589 = vpop.f32.mrb[0].mxu0
        %v590 = vadd.f32 0.0, %v589
        %591 = vmatprep.mubr.f32.mxu0 0.0
        %592 = vmatmul.mubr.f32.gmra.mrb[0].mxu0 %v352
        %v593 = vpop.f32.mrb[0].mxu0
        %v594 = vadd.f32 0.0, %v593
        %v595 = vpop.f32.mrb[0].mxu0
        %v596 = vadd.f32 0.0, %v595
        %597 = vmatprep.mubr.f32.mxu0 0.0
        %598 = vmatmul.mubr.f32.gmra.mrb[0].mxu0 %v355
        %v599 = vpop.f32.mrb[0].mxu0
        %v600 = vadd.f32 0.0, %v599
        %v601 = vpop.f32.mrb[0].mxu0
        %v602 = vadd.f32 0.0, %v601
        %603 = vmatprep.mubr.f32.mxu0 0.0
        %604 = vmatmul.mubr.f32.gmra.mrb[0].mxu0 %v358
        %v605 = vpop.f32.mrb[0].mxu0
        %v606 = vadd.f32 0.0, %v605
        %v607 = vpop.f32.mrb[0].mxu0
        %v608 = vadd.f32 0.0, %v607
        %609 = vmatprep.mubr.f32.mxu0 0.0
        %610 = vmatmul.mubr.f32.gmra.mrb[0].mxu0 %v361
        %v611 = vpop.f32.mrb[0].mxu0
        %v612 = vadd.f32 0.0, %v611
        %v613 = vpop.f32.mrb[0].mxu0
        %v614 = vadd.f32 0.0, %v613
        %615 = vmatprep.mubr.f32.mxu0 0.0
        %616 = vmatmul.mubr.f32.gmra.mrb[0].mxu0 %v364
        %v617 = vpop.f32.mrb[0].mxu0
        %v618 = vadd.f32 0.0, %v617
        %v619 = vpop.f32.mrb[0].mxu0
        %v620 = vadd.f32 0.0, %v619
        %621 = vmatprep.mubr.f32.mxu0 0.0
        %622 = vmatmul.mubr.f32.gmra.mrb[0].mxu0 %v367
        %v623 = vpop.f32.mrb[0].mxu0
        %v624 = vadd.f32 0.0, %v623
        %v625 = vpop.f32.mrb[0].mxu0
        %v626 = vadd.f32 0.0, %v625
        %627 = vmatprep.mubr.f32.mxu0 0.0
        %628 = vmatmul.mubr.f32.gmra.mrb[0].mxu0 %v370
        %v629 = vpop.f32.mrb[0].mxu0
        %v630 = vadd.f32 0.0, %v629
        %v631 = vpop.f32.mrb[0].mxu0
        %v632 = vadd.f32 0.0, %v631
        %633 = vdwg.mxu0
        %v634 = vmax.f32 %v444, 0.0
        %v635 = vmax.f32 %v446, 0.0
        %v636 = vmax.f32 %v450, 0.0
        %v637 = vmax.f32 %v452, 0.0
        %v638 = vmax.f32 %v456, 0.0
        %v639 = vmax.f32 %v458, 0.0
        %v640 = vmax.f32 %v462, 0.0
        %v641 = vmax.f32 %v464, 0.0
        %v642 = vmax.f32 %v468, 0.0
        %v643 = vmax.f32 %v470, 0.0
        %v644 = vmax.f32 %v474, 0.0
        %v645 = vmax.f32 %v476, 0.0
        %v646 = vmax.f32 %v480, 0.0
        %v647 = vmax.f32 %v482, 0.0
        %v648 = vmax.f32 %v486, 0.0
        %v649 = vmax.f32 %v488, 0.0
        %v650 = vmax.f32 %v492, 0.0
        %v651 = vmax.f32 %v494, 0.0
        %v652 = vmax.f32 %v498, 0.0
        %v653 = vmax.f32 %v500, 0.0
        %v654 = vmax.f32 %v504, 0.0
        %v655 = vmax.f32 %v506, 0.0
        %v656 = vmax.f32 %v510, 0.0
        %v657 = vmax.f32 %v512, 0.0
        %v658 = vmax.f32 %v516, 0.0
        %v659 = vmax.f32 %v518, 0.0
        %v660 = vmax.f32 %v522, 0.0
        %v661 = vmax.f32 %v524, 0.0
        %v662 = vmax.f32 %v528, 0.0
        %v663 = vmax.f32 %v530, 0.0
        %v664 = vmax.f32 %v534, 0.0
        %v665 = vmax.f32 %v536, 0.0
        %v666 = vmax.f32 %v540, 0.0
        %v667 = vmax.f32 %v542, 0.0
        %v668 = vmax.f32 %v546, 0.0
        %v669 = vmax.f32 %v548, 0.0
        %v670 = vmax.f32 %v552, 0.0
        %v671 = vmax.f32 %v554, 0.0
        %v672 = vmax.f32 %v558, 0.0
        %v673 = vmax.f32 %v560, 0.0
        %v674 = vmax.f32 %v564, 0.0
        %v675 = vmax.f32 %v566, 0.0
        %v676 = vmax.f32 %v570, 0.0
        %v677 = vmax.f32 %v572, 0.0
        %v678 = vmax.f32 %v576, 0.0
        %v679 = vmax.f32 %v578, 0.0
        %v680 = vmax.f32 %v582, 0.0
        %v681 = vmax.f32 %v584, 0.0
        %v682 = vmax.f32 %v588, 0.0
        %v683 = vmax.f32 %v590, 0.0
        %v684 = vmax.f32 %v594, 0.0
        %v685 = vmax.f32 %v596, 0.0
        %v686 = vmax.f32 %v600, 0.0
        %v687 = vmax.f32 %v602, 0.0
        %v688 = vmax.f32 %v606, 0.0
        %v689 = vmax.f32 %v608, 0.0
        %v690 = vmax.f32 %v612, 0.0
        %v691 = vmax.f32 %v614, 0.0
        %v692 = vmax.f32 %v618, 0.0
        %v693 = vmax.f32 %v620, 0.0
        %v694 = vmax.f32 %v624, 0.0
        %v695 = vmax.f32 %v626, 0.0
        %v696 = vmax.f32 %v630, 0.0
        %v697 = vmax.f32 %v632, 0.0
        %v698 = vld [vmem:[%s214] sm:$0x3]
        %v699 = vmul.f32 %v634, %v634
        %v700 = vmul.f32 %v635, %v635
        %v701 = vmul.f32 %v636, %v636
        %v702 = vmul.f32 %v637, %v637
        %v703 = vmul.f32 %v638, %v638
        %v704 = vmul.f32 %v639, %v639
        %v705 = vmul.f32 %v640, %v640
        %v706 = vmul.f32 %v641, %v641
        %v707 = vmul.f32 %v642, %v642
        %v708 = vmul.f32 %v643, %v643
        %v709 = vmul.f32 %v644, %v644
        %v710 = vmul.f32 %v645, %v645
        %v711 = vmul.f32 %v646, %v646
        %v712 = vmul.f32 %v647, %v647
        %v713 = vmul.f32 %v648, %v648
        %v714 = vmul.f32 %v649, %v649
        %v715 = vmul.f32 %v650, %v650
        %v716 = vmul.f32 %v651, %v651
        %v717 = vmul.f32 %v652, %v652
        %v718 = vmul.f32 %v653, %v653
        %v719 = vmul.f32 %v654, %v654
        %v720 = vmul.f32 %v655, %v655
        %v721 = vmul.f32 %v656, %v656
        %v722 = vmul.f32 %v657, %v657
        %v723 = vmul.f32 %v658, %v658
        %v724 = vmul.f32 %v659, %v659
        %v725 = vmul.f32 %v660, %v660
        %v726 = vmul.f32 %v661, %v661
        %v727 = vmul.f32 %v662, %v662
        %v728 = vmul.f32 %v663, %v663
        %v729 = vmul.f32 %v664, %v664
        %v730 = vmul.f32 %v665, %v665
        %v731 = vmul.f32 %v666, %v666
        %v732 = vmul.f32 %v667, %v667
        %v733 = vmul.f32 %v668, %v668
        %v734 = vmul.f32 %v669, %v669
        %v735 = vmul.f32 %v670, %v670
        %v736 = vmul.f32 %v671, %v671
        %v737 = vmul.f32 %v672, %v672
        %v738 = vmul.f32 %v673, %v673
        %v739 = vmul.f32 %v674, %v674
        %v740 = vmul.f32 %v675, %v675
        %v741 = vmul.f32 %v676, %v676
        %v742 = vmul.f32 %v677, %v677
        %v743 = vmul.f32 %v678, %v678
        %v744 = vmul.f32 %v679, %v679
        %v745 = vmul.f32 %v680, %v680
        %v746 = vmul.f32 %v681, %v681
        %v747 = vmul.f32 %v682, %v682
        %v748 = vmul.f32 %v683, %v683
        %v749 = vmul.f32 %v684, %v684
        %v750 = vmul.f32 %v685, %v685
        %v751 = vmul.f32 %v686, %v686
        %v752 = vmul.f32 %v687, %v687
        %v753 = vmul.f32 %v688, %v688
        %v754 = vmul.f32 %v689, %v689
        %v755 = vmul.f32 %v690, %v690
        %v756 = vmul.f32 %v691, %v691
        %v757 = vmul.f32 %v692, %v692
        %v758 = vmul.f32 %v693, %v693
        %v759 = vmul.f32 %v694, %v694
        %v760 = vmul.f32 %v695, %v695
        %v761 = vmul.f32 %v696, %v696
        %v762 = vmul.f32 %v697, %v697
        %v763 = vadd.f32 %v699, %v701
        %v764 = vadd.f32 %v763, %v703
        %v765 = vadd.f32 %v764, %v705
        %v766 = vadd.f32 %v765, %v707
        %v767 = vadd.f32 %v766, %v709
        %v768 = vadd.f32 %v767, %v711
        %v769 = vadd.f32 %v768, %v713
        %v770 = vadd.f32 %v769, %v715
        %v771 = vadd.f32 %v770, %v717
        %v772 = vadd.f32 %v771, %v719
        %v773 = vadd.f32 %v772, %v721
        %v774 = vadd.f32 %v773, %v723
        %v775 = vadd.f32 %v774, %v725
        %v776 = vadd.f32 %v775, %v727
        %v777 = vadd.f32 %v776, %v729
        %v778 = vadd.f32 %v777, %v731
        %v779 = vadd.f32 %v778, %v733
        %v780 = vadd.f32 %v779, %v735
        %v781 = vadd.f32 %v780, %v737
        %v782 = vadd.f32 %v781, %v739
        %v783 = vadd.f32 %v782, %v741
        %v784 = vadd.f32 %v783, %v743
        %v785 = vadd.f32 %v784, %v745
        %v786 = vadd.f32 %v785, %v747
        %v787 = vadd.f32 %v786, %v749
        %v788 = vadd.f32 %v787, %v751
        %v789 = vadd.f32 %v788, %v753
        %v790 = vadd.f32 %v789, %v755
        %v791 = vadd.f32 %v790, %v757
        %v792 = vadd.f32 %v791, %v759
        %v793 = vadd.f32 %v792, %v761
        %v794 = vrot.slane %v793, 4
        %v795 = vadd.f32 %v793, %v794
        %v796 = vrot.slane %v795, 2
        %v797 = vadd.f32 %v795, %v796
        %v798 = vrot.slane %v797, 1
        %v799 = vadd.f32 %v797, %v798
        %v800 = vadd.f32 %v700, %v702
        %v801 = vadd.f32 %v800, %v704
        %v802 = vadd.f32 %v801, %v706
        %v803 = vadd.f32 %v802, %v708
        %v804 = vadd.f32 %v803, %v710
        %v805 = vadd.f32 %v804, %v712
        %v806 = vadd.f32 %v805, %v714
        %v807 = vadd.f32 %v806, %v716
        %v808 = vadd.f32 %v807, %v718
        %v809 = vadd.f32 %v808, %v720
        %v810 = vadd.f32 %v809, %v722
        %v811 = vadd.f32 %v810, %v724
        %v812 = vadd.f32 %v811, %v726
        %v813 = vadd.f32 %v812, %v728
        %v814 = vadd.f32 %v813, %v730
        %v815 = vadd.f32 %v814, %v732
        %v816 = vadd.f32 %v815, %v734
        %v817 = vadd.f32 %v816, %v736
        %v818 = vadd.f32 %v817, %v738
        %v819 = vadd.f32 %v818, %v740
        %v820 = vadd.f32 %v819, %v742
        %v821 = vadd.f32 %v820, %v744
        %v822 = vadd.f32 %v821, %v746
        %v823 = vadd.f32 %v822, %v748
        %v824 = vadd.f32 %v823, %v750
        %v825 = vadd.f32 %v824, %v752
        %v826 = vadd.f32 %v825, %v754
        %v827 = vadd.f32 %v826, %v756
        %v828 = vadd.f32 %v827, %v758
        %v829 = vadd.f32 %v828, %v760
        %v830 = vadd.f32 %v829, %v762
        %v831 = vrot.slane %v830, 4
        %v832 = vadd.f32 %v830, %v831
        %v833 = vrot.slane %v832, 2
        %v834 = vadd.f32 %v832, %v833
        %v835 = vrot.slane %v834, 1
        %v836 = vadd.f32 %v834, %v835
        %v839 = vcombine.low %v799, %v836
        %v841 = vunpack.c.l.s4 1966171168
        %v842 = vunpack.c.0.s8 %v841
        %v843 = vlaneseq
        %v844 = vshrl.u32 %v843, 7
        %v845 = vsub.s32 %v842, %v844
        %v846 = vrot.slane %v839, %v845
        %v848 = vunpack.c.l.s4 1966171168
        %v849 = vunpack.c.0.s8 %v848
        %v850 = vlaneseq
        %v851 = vshrl.u32 %v850, 7
        %v852 = vsub.s32 %v849, %v851
        %v853 = vrot.slane %v846, %v852
        %v855 = vadd.f32 %v698, %v853
        %v856 = vlaneseq
        %vm857 = vcmp.ge.s32.totalorder %v856, 0
        %vm858 = vcmp.lt.s32.totalorder %v856, 256
        %vm859 = vmand %vm857, %vm858
        %860 = vst.msk [vmem:[%s214] sm:$0x3] %vm859, %v855
        %861 = vst [vmem:[%s207] sm:$0xff] %v634
        %862 = vst [vmem:[%s207 + $0x8] sm:$0xff] %v635
        %863 = vst [vmem:[%s207 + $0x10] sm:$0xff] %v636
        %864 = vst [vmem:[%s207 + $0x18] sm:$0xff] %v637
        %865 = vst [vmem:[%s207 + $0x20] sm:$0xff] %v638
        %866 = vst [vmem:[%s207 + $0x28] sm:$0xff] %v639
        %867 = vst [vmem:[%s207 + $0x30] sm:$0xff] %v640
        %868 = vst [vmem:[%s207 + $0x38] sm:$0xff] %v641
        %869 = vst [vmem:[%s207 + $0x40] sm:$0xff] %v642
        %870 = vst [vmem:[%s207 + $0x48] sm:$0xff] %v643
        %871 = vst [vmem:[%s207 + $0x50] sm:$0xff] %v644
        %872 = vst [vmem:[%s207 + $0x58] sm:$0xff] %v645
        %873 = vst [vmem:[%s207 + $0x60] sm:$0xff] %v646
        %874 = vst [vmem:[%s207 + $0x68] sm:$0xff] %v647
        %875 = vst [vmem:[%s207 + $0x70] sm:$0xff] %v648
        %876 = vst [vmem:[%s207 + $0x78] sm:$0xff] %v649
        %877 = vst [vmem:[%s207 + $0x80] sm:$0xff] %v650
        %878 = vst [vmem:[%s207 + $0x88] sm:$0xff] %v651
        %879 = vst [vmem:[%s207 + $0x90] sm:$0xff] %v652
        %880 = vst [vmem:[%s207 + $0x98] sm:$0xff] %v653
        %881 = vst [vmem:[%s207 + $0xa0] sm:$0xff] %v654
        %882 = vst [vmem:[%s207 + $0xa8] sm:$0xff] %v655
        %883 = vst [vmem:[%s207 + $0xb0] sm:$0xff] %v656
        %884 = vst [vmem:[%s207 + $0xb8] sm:$0xff] %v657
        %885 = vst [vmem:[%s207 + $0xc0] sm:$0xff] %v658
        %886 = vst [vmem:[%s207 + $0xc8] sm:$0xff] %v659
        %887 = vst [vmem:[%s207 + $0xd0] sm:$0xff] %v660
        %888 = vst [vmem:[%s207 + $0xd8] sm:$0xff] %v661
        %889 = vst [vmem:[%s207 + $0xe0] sm:$0xff] %v662
        %890 = vst [vmem:[%s207 + $0xe8] sm:$0xff] %v663
        %891 = vst [vmem:[%s207 + $0xf0] sm:$0xff] %v664
        %892 = vst [vmem:[%s207 + $0xf8] sm:$0xff] %v665
        %893 = vst [vmem:[%s207 + $0x100] sm:$0xff] %v666
        %894 = vst [vmem:[%s207 + $0x108] sm:$0xff] %v667
        %895 = vst [vmem:[%s207 + $0x110] sm:$0xff] %v668
        %896 = vst [vmem:[%s207 + $0x118] sm:$0xff] %v669
        %897 = vst [vmem:[%s207 + $0x120] sm:$0xff] %v670
        %898 = vst [vmem:[%s207 + $0x128] sm:$0xff] %v671
        %899 = vst [vmem:[%s207 + $0x130] sm:$0xff] %v672
        %900 = vst [vmem:[%s207 + $0x138] sm:$0xff] %v673
        %901 = vst [vmem:[%s207 + $0x140] sm:$0xff] %v674
        %902 = vst [vmem:[%s207 + $0x148] sm:$0xff] %v675
        %903 = vst [vmem:[%s207 + $0x150] sm:$0xff] %v676
        %904 = vst [vmem:[%s207 + $0x158] sm:$0xff] %v677
        %905 = vst [vmem:[%s207 + $0x160] sm:$0xff] %v678
        %906 = vst [vmem:[%s207 + $0x168] sm:$0xff] %v679
        %907 = vst [vmem:[%s207 + $0x170] sm:$0xff] %v680
        %908 = vst [vmem:[%s207 + $0x178] sm:$0xff] %v681
        %909 = vst [vmem:[%s207 + $0x180] sm:$0xff] %v682
        %910 = vst [vmem:[%s207 + $0x188] sm:$0xff] %v683
        %911 = vst [vmem:[%s207 + $0x190] sm:$0xff] %v684
        %912 = vst [vmem:[%s207 + $0x198] sm:$0xff] %v685
        %913 = vst [vmem:[%s207 + $0x1a0] sm:$0xff] %v686
        %914 = vst [vmem:[%s207 + $0x1a8] sm:$0xff] %v687
        %915 = vst [vmem:[%s207 + $0x1b0] sm:$0xff] %v688
        %916 = vst [vmem:[%s207 + $0x1b8] sm:$0xff] %v689
        %917 = vst [vmem:[%s207 + $0x1c0] sm:$0xff] %v690
        %918 = vst [vmem:[%s207 + $0x1c8] sm:$0xff] %v691
        %919 = vst [vmem:[%s207 + $0x1d0] sm:$0xff] %v692
        %920 = vst [vmem:[%s207 + $0x1d8] sm:$0xff] %v693
        %921 = vst [vmem:[%s207 + $0x1e0] sm:$0xff] %v694
        %922 = vst [vmem:[%s207 + $0x1e8] sm:$0xff] %v695
        %923 = vst [vmem:[%s207 + $0x1f0] sm:$0xff] %v696
        %924 = vst [vmem:[%s207 + $0x1f8] sm:$0xff] %v697
        %s925 = sand.u32 %s97, 1
        %s926 = scalar_lea.sflag [#allocation3], %s925
        %s927 = sand.u32 %s97, 1
        %s928 = smul.addr %s927, 512
        %s929 = scalar_lea.vmem [#allocation2], %s928
        %s930 = sand.u32 %s123, 1
        %s931 = scalar_lea.sflag [#allocation5], %s930
        %s932 = sand.u32 %s123, 1
        %s933 = smul.addr %s932, 2
        %s934 = scalar_lea.vmem [#allocation4], %s933
        // Predicated region
        $region33: #{tpu_custom_call.1} parent=27 // pred_check
          %p935 = pneg %p107
        $region34: #{tpu_custom_call.1} parent=27 // pred_check_branch
          %937 = sbr.rel (%p935) target = $region36
        $region35: #{tpu_custom_call.1} parent=27 // pred_region
          %s938 = smul.u32 32, %s26
          %s940 = ssub.s32 8192, 8192
          %941 = vsyncadd %s926, %s940
          %s942 = smul.addr %s938, 2
          %s943 = smul.addr %s25, 64
          %s944 = sadd.s32 %s942, %s943
          %s945 = smul.addr %s944, 128
          %s946 = scalar_lea.hbm %s2, %s945
          %s947 = sshll.u32 %s929, 4
          %s948 = int_to_ptr.vmem [resolvable:$true] %s947
          %953 = dma.vmem_to_hbm [thread:$0]  %s948, 8192, %s946, %s926, 256, 256, 16
        $region36: #{tpu_custom_call.1} parent=27 // pred_fallthru
          _
        // Predicated region
        $region37: #{tpu_custom_call.1} parent=27 // pred_check
          %p954 = pneg %p133
        $region38: #{tpu_custom_call.1} parent=27 // pred_check_branch
          %956 = sbr.rel (%p954) target = $region40
        $region39: #{tpu_custom_call.1} parent=27 // pred_region
          %s958 = ssub.s32 32, 32
          %959 = vsyncadd %s931, %s958
          %s960 = smul.addr %s25, 2
          %s961 = smul.addr %s960, 16
          %s962 = scalar_lea.hbm %s3, %s961
          %s964 = sshll.u32 %s934, 4
          %s965 = int_to_ptr.vmem [resolvable:$true] %s964
          %967 = dma.vmem_to_hbm [thread:$0]  %s965, 32, %s962, %s931
        $region40: #{tpu_custom_call.1} parent=27 // pred_fallthru
          _
      $region28: #{tpu_custom_call.1} parent=5 // pred_fallthru
        _
      %p968 = scmp.le.s32.totalorder 2, %s16
      // Predicated region
      $region41: #{tpu_custom_call.1} parent=5 // pred_check
        %p969 = pneg %p968
      $region42: #{tpu_custom_call.1} parent=5 // pred_check_branch
        %971 = sbr.rel (%p969) target = $region44
      $region43: #{tpu_custom_call.1} parent=5 // pred_region
        %s972 = ssub.s32 %s16, 2
        // Predicated region
        $region45: #{tpu_custom_call.1} parent=43 // pred_check
          %p973 = pneg %p113
        $region46: #{tpu_custom_call.1} parent=43 // pred_check_branch
          %975 = sbr.rel (%p973) target = $region48
        $region47: #{tpu_custom_call.1} parent=43 // pred_region
          %s976 = sand.u32 %s98, 1
          %s977 = scalar_lea.sflag [#allocation3], %s976
          %s978 = sand.u32 %s98, 1
          %s979 = smul.addr %s978, 512
          %s980 = scalar_lea.vmem [#allocation2], %s979
          %981 = dma.done %s977, 8192
        $region48: #{tpu_custom_call.1} parent=43 // pred_fallthru
          _
        // Predicated region
        $region49: #{tpu_custom_call.1} parent=43 // pred_check
          %p982 = pneg %p139
        $region50: #{tpu_custom_call.1} parent=43 // pred_check_branch
          %984 = sbr.rel (%p982) target = $region52
        $region51: #{tpu_custom_call.1} parent=43 // pred_region
          %s985 = sand.u32 %s124, 1
          %s986 = scalar_lea.sflag [#allocation5], %s985
          %s987 = sand.u32 %s124, 1
          %s988 = smul.addr %s987, 2
          %s989 = scalar_lea.vmem [#allocation4], %s988
          %990 = dma.done %s986, 32
        $region52: #{tpu_custom_call.1} parent=43 // pred_fallthru
          _
      $region44: #{tpu_custom_call.1} parent=5 // pred_fallthru
        _
    $region6: #{tpu_custom_call.1} parent=1 // loop_footer
      %s20 = sadd.s32 1, %s16
    $region7: #{tpu_custom_call.1} parent=1 // loop_footer_branch
      %15 = sbr.rel target = $region3
    $region8: #{tpu_custom_call.1} parent=1 // loop_exit
      _
    %991 = vsyncpa [#allocation3], 1
    %s992 = scalar_lea.sflag [#allocation3], 1
    %993 = vsyncpa %s992, 1
    %994 = vsyncpa [#allocation5], 1
    %s995 = scalar_lea.sflag [#allocation5], 1
    %996 = vsyncpa %s995, 1

</llo_original>
